<compile_context>
chip_gen: v5e
topology: v5e:2x2
jax: 0.10.0
libtpu: 0.0.40
codegen_flags: <defaults>
</compile_context>

<pallas_src>
import functools
import math

import jax
import jax.numpy as jnp
from jax import lax
from jax.experimental import pallas as pl
from jax.experimental.pallas import tpu as pltpu


def _round_up(x, m):
    return ((x + m - 1) // m) * m


def _largest_tile(dim, target):
    """Largest multiple-of-128 divisor of `dim` (dim is a multiple of 128)
    that is <= max(target, 128)."""
    t = min(max(target, 128), dim)
    t -= t % 128
    while t >= 128:
        if dim % t == 0:
            return t
        t -= 128
    return 128


# ---------------------------------------------------------------------------
# Kernels
# ---------------------------------------------------------------------------
def _swiglu_fast_kernel(x_ref, w_ref, b_ref, o_ref, *, compute_dtype):
    """Full-K path: one matmul pair + epilogue, no accumulator, no phasing."""
    dims = (((1,), (1,)), ((), ()))          # contract on dim 1 of both (x @ w.T)
    x = x_ref[...].astype(compute_dtype)      # (tm, K)
    hg = lax.dot_general(x, w_ref[0], dims, preferred_element_type=jnp.float32)
    hv = lax.dot_general(x, w_ref[1], dims, preferred_element_type=jnp.float32)
    b = b_ref[...].astype(jnp.float32)        # (2, tn): row 0 gate, row 1 value
    h1 = hg + b[0:1, :]
    h2 = hv + b[1:2, :]
    o_ref[...] = (h1 * jax.nn.sigmoid(h1) * h2).astype(o_ref.dtype)


def _swiglu_ktiled_kernel(x_ref, w_ref, b_ref, o_ref, acc_ref, *, compute_dtype):
    """K-tiled path: single (tm, 2*tn) f32 accumulator, SiLU*gate epilogue."""
    k = pl.program_id(2)
    tn = o_ref.shape[1]
    dims = (((1,), (1,)), ((), ()))
    x = x_ref[...].astype(compute_dtype)      # (tm, tk)
    hg = lax.dot_general(x, w_ref[0], dims, preferred_element_type=jnp.float32)
    hv = lax.dot_general(x, w_ref[1], dims, preferred_element_type=jnp.float32)

    @pl.when(k == 0)
    def _():                                  # no zero-init store: assign directly
        acc_ref[:, :tn] = hg
        acc_ref[:, tn:] = hv

    @pl.when(k > 0)
    def _():
        acc_ref[:, :tn] += hg
        acc_ref[:, tn:] += hv

    @pl.when(k == pl.num_programs(2) - 1)
    def _():
        b = b_ref[...].astype(jnp.float32)
        h1 = acc_ref[:, :tn] + b[0:1, :]
        h2 = acc_ref[:, tn:] + b[1:2, :]
        o_ref[...] = (h1 * jax.nn.sigmoid(h1) * h2).astype(o_ref.dtype)


# ---------------------------------------------------------------------------
# Wrapper
# ---------------------------------------------------------------------------
@functools.partial(
    jax.jit,
    static_argnames=("out_channels", "block_rows", "block_n", "block_k",
                     "max_fast_k", "compute_dtype"))
def swiglu(x, weight, bias=None, *, out_channels, block_rows=1024,
           block_n=512, block_k=512, max_fast_k=2048, compute_dtype=None):
    """SwiGLU forward.

    x:      [..., in_channels]
    weight: [2*out_channels, in_channels]   (PyTorch nn.Linear layout)
    bias:   [2*out_channels] or None
    returns [..., out_channels]
    """
    in_channels = x.shape[-1]
    if weight.shape != (2 * out_channels, in_channels):
        raise ValueError("weight must be [2*out_channels, in_channels]")

    # bf16 MXU compute by default for f32 inputs; accumulation stays f32.
    if compute_dtype is None:
        compute_dtype = jnp.bfloat16 if x.dtype == jnp.float32 else x.dtype
    compute_dtype = jnp.dtype(compute_dtype)

    lead_shape = x.shape[:-1]
    rows = math.prod(lead_shape) if lead_shape else 1
    x2d = x.reshape(rows, in_channels)

    if bias is None:
        bias = jnp.zeros((2 * out_channels,), x.dtype)

    # ---- N tiling (pad out_channels to a lane-dense multiple of 128) ----
    out_pad = _round_up(out_channels, 128)
    tn = _largest_tile(out_pad, block_n)
    n_n = out_pad // tn

    # ---- K handling: fast full-K path vs K-tiled accumulation path ----
    fast = in_channels <= max_fast_k
    if fast:
        tk = in_channels
        in_pad = in_channels
        nk = 1
    else:
        if block_k % 128 != 0:
            raise ValueError("block_k must be a multiple of 128")
        tk = block_k
        in_pad = _round_up(in_channels, tk)
        nk = in_pad // tk

    # ---- Row tiling ----
    tm = min(block_rows, rows)
    if tm < rows:
        tm = max(8, (tm // 8) * 8)
    # Guarantee >=2 parallel grid steps so both v7x TensorCores get work.
    if pl.cdiv(rows, tm) * n_n == 1 and rows >= 16:
        tm = _round_up(-(-rows // 2), 8)

    # ---- Right-size VMEM (stay comfortably inside v7x's 64 MiB/core) ----
    xb = jnp.dtype(x.dtype).itemsize
    wb = compute_dtype.itemsize
    ob = jnp.dtype(x.dtype).itemsize

    def footprint(tm_):
        f = (2 * tm_ * tk * xb            # x tiles, double-buffered
             + 2 * 2 * tn * tk * wb       # stacked weight tiles
             + 2 * tm_ * tn * ob          # output tiles
             + 2 * 2 * tn * 4)            # bias
        if nk > 1:
            f += tm_ * 2 * tn * 4         # f32 accumulator scratch
        return f

    while footprint(tm) > 32 * 1024 * 1024 and tm > 128:
        tm = max(128, ((tm // 2) // 8) * 8)
    n_rows = pl.cdiv(rows, tm)
    vmem_limit = int(min(max(footprint(tm) * 3 // 2 + (2 << 20), 16 << 20),
                         48 << 20))

    # ---- Operand prep (free reshapes; pads/casts only when needed) ----
    w3 = weight.reshape(2, out_channels, in_channels)   # [0]=gate rows, [1]=value rows
    if w3.dtype != compute_dtype:
        w3 = w3.astype(compute_dtype)                    # cast once, not per tile
    b2 = bias.reshape(2, out_channels)
    if out_pad != out_channels or in_pad != in_channels:
        w3 = jnp.pad(w3, ((0, 0), (0, out_pad - out_channels),
                          (0, in_pad - in_channels)))
    if out_pad != out_channels:
        b2 = jnp.pad(b2, ((0, 0), (0, out_pad - out_channels)))
    if in_pad != in_channels:
        x2d = jnp.pad(x2d, ((0, 0), (0, in_pad - in_channels)))

    out_shape = jax.ShapeDtypeStruct((rows, out_pad), x.dtype)

    if fast:
        kernel = functools.partial(_swiglu_fast_kernel, compute_dtype=compute_dtype)
        out2d = pl.pallas_call(
            kernel,
            out_shape=out_shape,
            grid_spec=pltpu.PrefetchScalarGridSpec(
                num_scalar_prefetch=0,
                # N outermost, rows innermost: weight block index is constant
                # across row tiles -> fetched from HBM once per N tile.
                grid=(n_n, n_rows),
                in_specs=[
                    pl.BlockSpec((tm, tk), lambda j, i: (i, 0)),
                    pl.BlockSpec((2, tn, tk), lambda j, i: (0, j, 0)),
                    pl.BlockSpec((2, tn), lambda j, i: (0, j)),
                ],
                out_specs=pl.BlockSpec((tm, tn), lambda j, i: (i, j)),
            ),
            compiler_params=pltpu.CompilerParams(
                dimension_semantics=("parallel", "parallel"),
                vmem_limit_bytes=vmem_limit,
            ),
        )(x2d, w3, b2)
    else:
        kernel = functools.partial(_swiglu_ktiled_kernel, compute_dtype=compute_dtype)
        out2d = pl.pallas_call(
            kernel,
            out_shape=out_shape,
            grid_spec=pltpu.PrefetchScalarGridSpec(
                num_scalar_prefetch=0,
                grid=(n_rows, n_n, nk),
                in_specs=[
                    pl.BlockSpec((tm, tk), lambda i, j, k: (i, k)),
                    pl.BlockSpec((2, tn, tk), lambda i, j, k: (0, j, k)),
                    pl.BlockSpec((2, tn), lambda i, j, k: (0, j)),
                ],
                out_specs=pl.BlockSpec((tm, tn), lambda i, j, k: (i, j)),
                scratch_shapes=[pltpu.VMEM((tm, 2 * tn), jnp.float32)],
            ),
            compiler_params=pltpu.CompilerParams(
                dimension_semantics=("parallel", "parallel", "arbitrary"),
                vmem_limit_bytes=vmem_limit,
            ),
        )(x2d, w3, b2)

    if out_pad != out_channels:
        out2d = out2d[:, :out_channels]
    return out2d.reshape(*lead_shape, out_channels)


# ---------------------------------------------------------------------------
# Pure-JAX reference
# ---------------------------------------------------------------------------
def _ref_swiglu(x, weight, bias, out_channels, compute_dtype=None):
    cd = x.dtype if compute_dtype is None else jnp.dtype(compute_dtype)
    h = lax.dot_general(x.astype(cd), weight.astype(cd),
                        (((x.ndim - 1,), (1,)), ((), ())),
                        preferred_element_type=jnp.float32)
    h = h + bias.astype(jnp.float32)
    h1 = h[..., :out_channels]
    h2 = h[..., out_channels:]
    return (h1 * jax.nn.sigmoid(h1) * h2).astype(x.dtype)


if __name__ == "__main__":
    key = jax.random.PRNGKey(0)
    k_x, k_w, k_b, k_x2, k_w2, k_b2 = jax.random.split(key, 6)

    # --- Test 1: default path (fast, bf16 MXU compute, f32 accum/epilogue) --
    batch, seq, in_c, out_c = 2, 8, 128, 128
    bound = 1.0 / math.sqrt(in_c)
    x = jax.random.normal(k_x, (batch, seq, in_c), jnp.float32)
    weight = jax.random.uniform(k_w, (2 * out_c, in_c), jnp.float32, -bound, bound)
    bias = jax.random.uniform(k_b, (2 * out_c,), jnp.float32, -bound, bound)

    out = jax.block_until_ready(swiglu(x, weight, bias, out_channels=out_c))
    ref_bf = _ref_swiglu(x, weight, bias, out_c, compute_dtype=jnp.bfloat16)
    assert out.shape == (batch, seq, out_c)
    assert jnp.allclose(out, ref_bf, atol=2e-2, rtol=2e-2)

    # --- Test 2: K-tiled path, partial row tiles, out_channels padding ------
    in_c2, out_c2 = 256, 192            # out 192 -> padded to 256 internally
    bound2 = 1.0 / math.sqrt(in_c2)
    x2 = jax.random.normal(k_x2, (300, in_c2), jnp.float32)   # 3 row tiles of 128
    w2 = jax.random.uniform(k_w2, (2 * out_c2, in_c2), jnp.float32, -bound2, bound2)
    b2 = jax.random.uniform(k_b2, (2 * out_c2,), jnp.float32, -bound2, bound2)
    out2 = jax.block_until_ready(
        swiglu(x2, w2, b2, out_channels=out_c2, block_rows=128, block_k=128,
               max_fast_k=128, compute_dtype=jnp.float32))
    ref2 = _ref_swiglu(x2, w2, b2, out_c2)
    assert out2.shape == (300, out_c2)
    assert jnp.allclose(out2, ref2, atol=1e-5, rtol=1e-5)

    # --- Test 3: fast path with explicit f32 compute (tight numerics) -------
    out3 = jax.block_until_ready(
        swiglu(x, weight, bias, out_channels=out_c, compute_dtype=jnp.float32))
    ref3 = _ref_swiglu(x, weight, bias, out_c)
    assert jnp.allclose(out3, ref3, atol=1e-5, rtol=1e-5)

    print("KERNEL_OK")
</pallas_src>

<mosaic_0001>
module attributes {stable_mosaic.version = 11 : i64} {
  func.func @_swiglu_fast_kernel(%arg0: i32, %arg1: i32, %arg2: memref<8x128xf32, #tpu.memory_space<vmem>>, %arg3: memref<2x128x128xbf16, #tpu.memory_space<vmem>>, %arg4: memref<2x128xf32, #tpu.memory_space<vmem>>, %arg5: memref<8x128xf32, #tpu.memory_space<vmem>>) attributes {dimension_semantics = [#tpu.dimension_semantics<parallel>, #tpu.dimension_semantics<parallel>], iteration_bounds = array<i64: 1, 2>, scalar_prefetch = 0 : i64, scratch_operands = 0 : i64, tpu.core_type = #tpu.core_type<tc>, window_params = [{transform_indices = @transform_0, window_bounds = array<i64: 8, 128>}, {transform_indices = @transform_1, window_bounds = array<i64: 2, 128, 128>}, {transform_indices = @transform_2, window_bounds = array<i64: 2, 128>}, {transform_indices = @transform_3, window_bounds = array<i64: 8, 128>}]} {
    %c0 = arith.constant 0 : index
    %c0_0 = arith.constant 0 : index
    %0 = vector.load %arg2[%c0, %c0_0] : memref<8x128xf32, #tpu.memory_space<vmem>>, vector<8x128xf32>
    %1 = arith.truncf %0 : vector<8x128xf32> to vector<8x128xbf16>
    %c0_1 = arith.constant 0 : index
    %c0_2 = arith.constant 0 : index
    %c0_3 = arith.constant 0 : index
    %2 = vector.load %arg3[%c0_1, %c0_2, %c0_3] : memref<2x128x128xbf16, #tpu.memory_space<vmem>>, vector<1x128x128xbf16>
    %3 = vector.shape_cast %2 : vector<1x128x128xbf16> to vector<128x128xbf16>
    %cst = arith.constant dense<0.000000e+00> : vector<8x128xf32>
    %4 = tpu.matmul %1, %3, %cst {dimension_numbers = #tpu.dot_dimension_numbers<[1], [1], [0], [0], [0, 0, 1, 0], [], []>} : vector<8x128xbf16>, vector<128x128xbf16>, vector<8x128xf32> -> vector<8x128xf32>
    %c1 = arith.constant 1 : index
    %c0_4 = arith.constant 0 : index
    %c0_5 = arith.constant 0 : index
    %5 = vector.load %arg3[%c1, %c0_4, %c0_5] : memref<2x128x128xbf16, #tpu.memory_space<vmem>>, vector<1x128x128xbf16>
    %6 = vector.shape_cast %5 : vector<1x128x128xbf16> to vector<128x128xbf16>
    %cst_6 = arith.constant dense<0.000000e+00> : vector<8x128xf32>
    %7 = tpu.matmul %1, %6, %cst_6 {dimension_numbers = #tpu.dot_dimension_numbers<[1], [1], [0], [0], [0, 0, 1, 0], [], []>} : vector<8x128xbf16>, vector<128x128xbf16>, vector<8x128xf32> -> vector<8x128xf32>
    %c0_7 = arith.constant 0 : index
    %c0_8 = arith.constant 0 : index
    %8 = vector.load %arg4[%c0_7, %c0_8] : memref<2x128xf32, #tpu.memory_space<vmem>>, vector<2x128xf32>
    %9 = vector.extract_strided_slice %8 {offsets = [0, 0], sizes = [1, 128], strides = [1, 1]} : vector<2x128xf32> to vector<1x128xf32>
    %10 = vector.broadcast %9 : vector<1x128xf32> to vector<8x128xf32>
    %11 = arith.addf %4, %10 : vector<8x128xf32>
    %12 = vector.extract_strided_slice %8 {offsets = [1, 0], sizes = [1, 128], strides = [1, 1]} : vector<2x128xf32> to vector<1x128xf32>
    %13 = vector.broadcast %12 : vector<1x128xf32> to vector<8x128xf32>
    %14 = arith.addf %7, %13 : vector<8x128xf32>
    %15 = arith.negf %11 : vector<8x128xf32>
    %16 = math.exp %15 : vector<8x128xf32>
    %cst_9 = arith.constant 1.000000e+00 : f32
    %17 = vector.broadcast %cst_9 : f32 to vector<8x128xf32>
    %18 = arith.addf %17, %16 : vector<8x128xf32>
    %19 = arith.divf %17, %18 : vector<8x128xf32>
    %20 = arith.mulf %11, %19 : vector<8x128xf32>
    %21 = arith.mulf %20, %14 : vector<8x128xf32>
    %c0_10 = arith.constant 0 : index
    %c0_11 = arith.constant 0 : index
    %22 = vector.load %arg5[%c0_10, %c0_11] : memref<8x128xf32, #tpu.memory_space<vmem>>, vector<8x128xf32>
    tpu.vector_store %arg5[%c0_10, %c0_11], %21 {strides = array<i32>} : memref<8x128xf32, #tpu.memory_space<vmem>>, vector<8x128xf32>,
    return
  }
  func.func @transform_0(%arg0: i32, %arg1: i32) -> (i32, i32) {
    %c0_i32 = arith.constant 0 : i32
    %c0_i32_0 = arith.constant 0 : i32
    return %arg1, %c0_i32 : i32, i32
  }
  func.func @transform_1(%arg0: i32, %arg1: i32) -> (i32, i32, i32) {
    %c0_i32 = arith.constant 0 : i32
    %c0_i32_0 = arith.constant 0 : i32
    %c0_i32_1 = arith.constant 0 : i32
    return %c0_i32, %arg0, %c0_i32_0 : i32, i32, i32
  }
  func.func @transform_2(%arg0: i32, %arg1: i32) -> (i32, i32) {
    %c0_i32 = arith.constant 0 : i32
    %c0_i32_0 = arith.constant 0 : i32
    return %c0_i32, %arg0 : i32, i32
  }
  func.func @transform_3(%arg0: i32, %arg1: i32) -> (i32, i32) {
    %c0_i32 = arith.constant 0 : i32
    return %arg1, %arg0 : i32, i32
  }
}

</mosaic_0001>

<llo_original>
// kernel: swiglu.1
$region0: #{swiglu.1}
  #allocation0 [shape = 'u32[]', space=smem, size = 0x4, offset = 0x4, fixed_abs, tag = 'smem constant byte address 0x4 - core index']
  #allocation1 [shape = 'u32[72,128]{1,0:T(1,128)}', space=vmem, size = 0x9000, scoped, tag = 'internal scratch']
  %s0 = inlined_call_operand.vmem [shape: f32[16,128], index: 0, kind: input, shape index: {}]
  %s1 = inlined_call_operand.vmem [shape: bf16[2,128,128], index: 1, kind: input, shape index: {}]
  %s2 = inlined_call_operand.vmem [shape: f32[2,128], index: 2, kind: input, shape index: {}]
  %s3 = inlined_call_operand.hbm [shape: f32[16,128], index: 3, kind: output, shape index: {}]
  %s4 = sld [smem:[#allocation0]]
  $region45: #{swiglu.1} parent=0
    _
  %s6 = ssub.s32 1, %s4
  %s7 = scalar_select 0, %s6, %s4
  $region1: #{swiglu.1} parent=0
    #allocation2 [shape = 'u8[8192]{0}', space=vmem, size = 0x2000, scoped, tag = 'output window, operand 0']
    #allocation3 [shape = 's32[2]{0}', space=sflag, size = 0x8, scoped, tag = 'scoped memory for swiglu.1']
    %8 = vsyncpa [#allocation3], 0
    %s9 = scalar_lea.sflag [#allocation3], 1
    %10 = vsyncpa %s9, 0
    loop: start=0, step=1, limit=4
    $region2: #{swiglu.1} parent=1 // loop_pre_header
      _
    $region3: #{swiglu.1} parent=1 // loop_header
      %s12 = sphi 0, %s16
      %p13 = scmp.ge.s32.totalorder %s12, 4
      %s19 = sphi 0, %s31
      %s20 = sphi 0, %s27
      %s21 = sphi 0, %s19
      %s22 = sphi 0, %s20
      %s23 = sphi 0, %s21
      %s24 = sphi 0, %s22
      %s34 = sphi 0, %s36
      %s37 = sphi 0, %s34
      %s38 = sphi 0, %s37
      %s54 = sphi 0, %s38
      %s60 = sphi 0, %s62
      %s63 = sphi 0, %s60
      %s64 = sphi 0, %s63
      %s80 = sphi 0, %s64
      %s86 = sphi 0, %s88
      %s89 = sphi 0, %s86
      %s90 = sphi 0, %s89
      %s106 = sphi 0, %s90
      %s114 = sphi 0, %s116
      %s117 = sphi 0, %s114
      %s118 = sphi 0, %s117
      %s134 = sphi 0, %s118
    $region4: #{swiglu.1} parent=1 // loop_header_branch
      %15 = sbr.rel (%p13) target = $region8
    $region5: #{swiglu.1} parent=1 // loop_body
      %s17 = ssub.s32 %s12, 1
      %s18 = ssub.s32 %s12, 2
      %s25 = sadd.s32 1, %s20
      %p26 = scmp.ge.s32.totalorder %s25, 2
      %s27 = scalar_select %p26, 0, %s25
      %s28 = sadd.s32 1, %s19
      %s29 = scalar_select %p26, %s28, %s19
      %p30 = scmp.ge.s32.totalorder %s29, 1
      %s31 = scalar_select %p30, 0, %s29
      %s32 = ssub.s32 %s20, %s27
      %p33 = scmp.eq.s32.totalorder %s32, 0
      %s35 = sadd.s32 %s34, 1
      %s36 = scalar_select %p33, %s34, %s35
      %p39 = pneg %p33
      %p40 = scmp.eq.s32.totalorder %s12, 1
      %p41 = por %p39, %p40
      %p42 = scmp.ne.s32.totalorder %s34, %s37
      %p43 = scmp.eq.s32.totalorder %s12, 0
      %p44 = por %p42, %p43
      %p45 = scmp.ne.s32.totalorder %s34, %s37
      %p46 = scmp.eq.s32.totalorder %s17, 1
      %p47 = por %p45, %p46
      %p48 = scmp.ne.s32.totalorder %s37, %s38
      %p49 = scmp.eq.s32.totalorder %s17, 0
      %p50 = por %p48, %p49
      %p51 = scmp.ne.s32.totalorder %s37, %s38
      %p52 = scmp.eq.s32.totalorder %s18, 1
      %p53 = por %p51, %p52
      %p55 = scmp.ne.s32.totalorder %s38, %s54
      %p56 = scmp.eq.s32.totalorder %s18, 0
      %p57 = por %p55, %p56
      %s58 = ssub.s32 %s19, %s31
      %p59 = scmp.eq.s32.totalorder %s58, 0
      %s61 = sadd.s32 %s60, 1
      %s62 = scalar_select %p59, %s60, %s61
      %p65 = pneg %p59
      %p66 = scmp.eq.s32.totalorder %s12, 1
      %p67 = por %p65, %p66
      %p68 = scmp.ne.s32.totalorder %s60, %s63
      %p69 = scmp.eq.s32.totalorder %s12, 0
      %p70 = por %p68, %p69
      %p71 = scmp.ne.s32.totalorder %s60, %s63
      %p72 = scmp.eq.s32.totalorder %s17, 1
      %p73 = por %p71, %p72
      %p74 = scmp.ne.s32.totalorder %s63, %s64
      %p75 = scmp.eq.s32.totalorder %s17, 0
      %p76 = por %p74, %p75
      %p77 = scmp.ne.s32.totalorder %s63, %s64
      %p78 = scmp.eq.s32.totalorder %s18, 1
      %p79 = por %p77, %p78
      %p81 = scmp.ne.s32.totalorder %s64, %s80
      %p82 = scmp.eq.s32.totalorder %s18, 0
      %p83 = por %p81, %p82
      %s84 = ssub.s32 %s19, %s31
      %p85 = scmp.eq.s32.totalorder %s84, 0
      %s87 = sadd.s32 %s86, 1
      %s88 = scalar_select %p85, %s86, %s87
      %p91 = pneg %p85
      %p92 = scmp.eq.s32.totalorder %s12, 1
      %p93 = por %p91, %p92
      %p94 = scmp.ne.s32.totalorder %s86, %s89
      %p95 = scmp.eq.s32.totalorder %s12, 0
      %p96 = por %p94, %p95
      %p97 = scmp.ne.s32.totalorder %s86, %s89
      %p98 = scmp.eq.s32.totalorder %s17, 1
      %p99 = por %p97, %p98
      %p100 = scmp.ne.s32.totalorder %s89, %s90
      %p101 = scmp.eq.s32.totalorder %s17, 0
      %p102 = por %p100, %p101
      %p103 = scmp.ne.s32.totalorder %s89, %s90
      %p104 = scmp.eq.s32.totalorder %s18, 1
      %p105 = por %p103, %p104
      %p107 = scmp.ne.s32.totalorder %s90, %s106
      %p108 = scmp.eq.s32.totalorder %s18, 0
      %p109 = por %p107, %p108
      %s110 = ssub.s32 %s20, %s27
      %s111 = ssub.s32 %s19, %s31
      %s112 = sor.u32 %s110, %s111
      %p113 = scmp.eq.s32.totalorder %s112, 0
      %s115 = sadd.s32 %s114, 1
      %s116 = scalar_select %p113, %s114, %s115
      %p119 = pneg %p113
      %p120 = scmp.eq.s32.totalorder %s12, 1
      %p121 = por %p119, %p120
      %p122 = scmp.ne.s32.totalorder %s114, %s117
      %p123 = scmp.eq.s32.totalorder %s12, 0
      %p124 = por %p122, %p123
      %p125 = scmp.ne.s32.totalorder %s114, %s117
      %p126 = scmp.eq.s32.totalorder %s17, 1
      %p127 = por %p125, %p126
      %p128 = scmp.ne.s32.totalorder %s117, %s118
      %p129 = scmp.eq.s32.totalorder %s17, 0
      %p130 = por %p128, %p129
      %p131 = scmp.ne.s32.totalorder %s117, %s118
      %p132 = scmp.eq.s32.totalorder %s18, 1
      %p133 = por %p131, %p132
      %p135 = scmp.ne.s32.totalorder %s118, %s134
      %p136 = scmp.eq.s32.totalorder %s18, 0
      %p137 = por %p135, %p136
      %p138 = scmp.le.s32.totalorder 1, %s12
      %p139 = scmp.lt.s32.totalorder %s12, 3
      %p140 = pnand %p138, %p139
      %p141 = pneg %p140
      // Predicated region
      $region9: #{swiglu.1} parent=5 // pred_check
        _
      $region10: #{swiglu.1} parent=5 // pred_check_branch
        %143 = sbr.rel (%p140) target = $region12
      $region11: #{swiglu.1} parent=5 // pred_region
        %s144 = ssub.s32 %s12, 1
        // Predicated region
        $region13: #{swiglu.1} parent=11 // pred_check
          %p145 = pneg %p76
        $region14: #{swiglu.1} parent=11 // pred_check_branch
          %147 = sbr.rel (%p145) target = $region16
        $region15: #{swiglu.1} parent=11 // pred_region
          %s148 = smul.u32 16, %s21
          %p149 = scmp.lt.s32.totalorder %s148, 15
          %s150 = scalar_select %p149, %s148, 15
          %s151 = smul.addr %s150, 4
          %s152 = scalar_lea.vmem %s1, %s151
          %s153 = smul.u32 16, %s21
        $region16: #{swiglu.1} parent=11 // pred_fallthru
          _
        // Predicated region
        $region17: #{swiglu.1} parent=11 // pred_check
          %p154 = pneg %p102
        $region18: #{swiglu.1} parent=11 // pred_check_branch
          %156 = sbr.rel (%p154) target = $region20
        $region19: #{swiglu.1} parent=11 // pred_region
          %p157 = scmp.lt.s32.totalorder %s21, 0
          %s158 = scalar_select %p157, %s21, 0
          %s159 = smul.addr %s158, 2
          %s160 = scalar_lea.vmem %s2, %s159
        $region20: #{swiglu.1} parent=11 // pred_fallthru
          _
      $region12: #{swiglu.1} parent=5 // pred_fallthru
        _
      %p161 = scmp.lt.s32.totalorder %s12, 2
      // Predicated region
      $region21: #{swiglu.1} parent=5 // pred_check
        %p162 = pneg %p161
      $region22: #{swiglu.1} parent=5 // pred_check_branch
        %164 = sbr.rel (%p162) target = $region24
      $region23: #{swiglu.1} parent=5 // pred_region
        // Predicated region
        $region25: #{swiglu.1} parent=23 // pred_check
          %p165 = pneg %p44
        $region26: #{swiglu.1} parent=23 // pred_check_branch
          %167 = sbr.rel (%p165) target = $region28
        $region27: #{swiglu.1} parent=23 // pred_region
          %p168 = scmp.lt.s32.totalorder %s20, 1
          %s169 = scalar_select %p168, %s20, 1
          %s170 = smul.addr %s169, 8
          %s171 = scalar_lea.vmem %s0, %s170
        $region28: #{swiglu.1} parent=23 // pred_fallthru
          _
      $region24: #{swiglu.1} parent=5 // pred_fallthru
        _
      %p172 = scmp.le.s32.totalorder 1, %s12
      %p173 = scmp.lt.s32.totalorder %s12, 3
      %p174 = pnand %p172, %p173
      %p175 = pneg %p174
      // Predicated region
      $region29: #{swiglu.1} parent=5 // pred_check
        _
      $region30: #{swiglu.1} parent=5 // pred_check_branch
        %177 = sbr.rel (%p174) target = $region32
      $region31: #{swiglu.1} parent=5 // pred_region
        %s178 = ssub.s32 %s12, 1
        %p179 = scmp.lt.s32.totalorder %s22, 1
        %s180 = scalar_select %p179, %s22, 1
        %s181 = smul.addr %s180, 8
        %s182 = scalar_lea.vmem %s0, %s181
        %p183 = pneg %p50
        %p184 = pneg %p47
        %s185 = smul.u32 16, %s21
        %p186 = scmp.lt.s32.totalorder %s185, 15
        %s187 = scalar_select %p186, %s185, 15
        %s188 = smul.addr %s187, 4
        %s189 = scalar_lea.vmem %s1, %s188
        %p190 = pneg %p76
        %p191 = pneg %p73
        %p192 = scmp.lt.s32.totalorder %s21, 0
        %s193 = scalar_select %p192, %s21, 0
        %s194 = smul.addr %s193, 2
        %s195 = scalar_lea.vmem %s2, %s194
        %p196 = pneg %p102
        %p197 = pneg %p99
        %p198 = pneg %p130
        %p199 = pneg %p127
        %s200 = sand.u32 %s117, 1
        %s201 = scalar_lea.sflag [#allocation3], %s200
        %s202 = sand.u32 %s117, 1
        %s203 = smul.addr %s202, 8
        %s204 = scalar_lea.vmem [#allocation2], %s203
        %p205 = scmp.lt.s32.totalorder %s22, 1
        %s206 = scalar_select %p205, %s22, 1
        %s207 = smul.addr %s206, 8
        %s208 = scalar_lea.vmem %s0, %s207
        %s209 = smul.u32 16, %s21
        %p210 = scmp.lt.s32.totalorder %s209, 15
        %s211 = scalar_select %p210, %s209, 15
        %s212 = smul.addr %s211, 4
        %s213 = scalar_lea.vmem %s1, %s212
        %s214 = smul.u32 16, %s21
        %p215 = scmp.lt.s32.totalorder %s21, 0
        %s216 = scalar_select %p215, %s21, 0
        %s217 = smul.addr %s216, 2
        %s218 = scalar_lea.vmem %s2, %s217
        %v219 = vld [vmem:[%s208] sm:$0xff]
        %v220 = vpack.c.bf16 %v219, %v219
        %v221 = vld [vmem:[%s213] sm:$0xf]
        %v222 = vld [vmem:[%s213 + $0x4] sm:$0xf]
        %v223 = vld [vmem:[%s213 + $0x8] sm:$0xf]
        %v224 = vld [vmem:[%s213 + $0xc] sm:$0xf]
        %v225 = vld [vmem:[%s213 + $0x10] sm:$0xf]
        %v226 = vld [vmem:[%s213 + $0x14] sm:$0xf]
        %v227 = vld [vmem:[%s213 + $0x18] sm:$0xf]
        %v228 = vld [vmem:[%s213 + $0x1c] sm:$0xf]
        %v229 = vld [vmem:[%s213 + $0x20] sm:$0xf]
        %v230 = vld [vmem:[%s213 + $0x24] sm:$0xf]
        %v231 = vld [vmem:[%s213 + $0x28] sm:$0xf]
        %v232 = vld [vmem:[%s213 + $0x2c] sm:$0xf]
        %v233 = vld [vmem:[%s213 + $0x30] sm:$0xf]
        %v234 = vld [vmem:[%s213 + $0x34] sm:$0xf]
        %v235 = vld [vmem:[%s213 + $0x38] sm:$0xf]
        %v236 = vld [vmem:[%s213 + $0x3c] sm:$0xf]
        %s237 = scalar_lea.vmem %s213, 64
        %v238 = vld [vmem:[%s237] sm:$0xf]
        %v239 = vld [vmem:[%s237 + $0x4] sm:$0xf]
        %v240 = vld [vmem:[%s237 + $0x8] sm:$0xf]
        %v241 = vld [vmem:[%s237 + $0xc] sm:$0xf]
        %v242 = vld [vmem:[%s237 + $0x10] sm:$0xf]
        %v243 = vld [vmem:[%s237 + $0x14] sm:$0xf]
        %v244 = vld [vmem:[%s237 + $0x18] sm:$0xf]
        %v245 = vld [vmem:[%s237 + $0x1c] sm:$0xf]
        %v246 = vld [vmem:[%s237 + $0x20] sm:$0xf]
        %v247 = vld [vmem:[%s237 + $0x24] sm:$0xf]
        %v248 = vld [vmem:[%s237 + $0x28] sm:$0xf]
        %v249 = vld [vmem:[%s237 + $0x2c] sm:$0xf]
        %v250 = vld [vmem:[%s237 + $0x30] sm:$0xf]
        %v251 = vld [vmem:[%s237 + $0x34] sm:$0xf]
        %v252 = vld [vmem:[%s237 + $0x38] sm:$0xf]
        %v253 = vld [vmem:[%s237 + $0x3c] sm:$0xf]
        %v254 = vld [vmem:[%s218] sm:$0x3]
        %v255 = vperm.slane %v254, 0
        %v272 = vunpack.c.l.b16 %v221
        %v273 = vunpack.c.l.b16 %v222
        %v274 = vunpack.c.l.b16 %v223
        %v275 = vunpack.c.l.b16 %v224
        %v276 = vunpack.c.l.b16 %v225
        %v277 = vunpack.c.l.b16 %v226
        %v278 = vunpack.c.l.b16 %v227
        %v279 = vunpack.c.l.b16 %v228
        %v280 = vunpack.c.l.b16 %v229
        %v281 = vunpack.c.l.b16 %v230
        %v282 = vunpack.c.l.b16 %v231
        %v283 = vunpack.c.l.b16 %v232
        %v284 = vunpack.c.l.b16 %v233
        %v285 = vunpack.c.l.b16 %v234
        %v286 = vunpack.c.l.b16 %v235
        %v287 = vunpack.c.l.b16 %v236
        %v288 = vpack.c.b16 %v273, %v272
        %v289 = vpack.c.b16 %v275, %v274
        %v290 = vpack.c.b16 %v277, %v276
        %v291 = vpack.c.b16 %v279, %v278
        %v292 = vpack.c.b16 %v281, %v280
        %v293 = vpack.c.b16 %v283, %v282
        %v294 = vpack.c.b16 %v285, %v284
        %v295 = vpack.c.b16 %v287, %v286
        %304 = vmatpush.bf16.xpose.msra.mxu0 %v295
        %305 = vmatpush.bf16.xpose.msra.mxu0 %v294
        %306 = vmatpush.bf16.xpose.msra.mxu0 %v293
        %307 = vmatpush.bf16.xpose.msra.mxu0 %v292
        %308 = vmatpush.bf16.xpose.msra.mxu0 %v291
        %309 = vmatpush.bf16.xpose.msra.mxu0 %v290
        %310 = vmatpush.bf16.xpose.msra.mxu0 %v289
        %311 = vmatpush.bf16.xpose.msra.mxu0 %v288
        %312 = vmatmul.bf16.gmra.mxu0 %v220
        %v313 = vpop.f32.mrf.mxu0
        %v314 = vadd.f32 %v255, %v313
        %v315 = vpop.f32.mrf.mxu0
        %316 = vdwg.mxu0
        %v317 = vperm.slane %v254, 1
        %v334 = vunpack.c.l.b16 %v238
        %v335 = vunpack.c.l.b16 %v239
        %v336 = vunpack.c.l.b16 %v240
        %v337 = vunpack.c.l.b16 %v241
        %v338 = vunpack.c.l.b16 %v242
        %v339 = vunpack.c.l.b16 %v243
        %v340 = vunpack.c.l.b16 %v244
        %v341 = vunpack.c.l.b16 %v245
        %v342 = vunpack.c.l.b16 %v246
        %v343 = vunpack.c.l.b16 %v247
        %v344 = vunpack.c.l.b16 %v248
        %v345 = vunpack.c.l.b16 %v249
        %v346 = vunpack.c.l.b16 %v250
        %v347 = vunpack.c.l.b16 %v251
        %v348 = vunpack.c.l.b16 %v252
        %v349 = vunpack.c.l.b16 %v253
        %v350 = vpack.c.b16 %v335, %v334
        %v351 = vpack.c.b16 %v337, %v336
        %v352 = vpack.c.b16 %v339, %v338
        %v353 = vpack.c.b16 %v341, %v340
        %v354 = vpack.c.b16 %v343, %v342
        %v355 = vpack.c.b16 %v345, %v344
        %v356 = vpack.c.b16 %v347, %v346
        %v357 = vpack.c.b16 %v349, %v348
        %366 = vmatpush.bf16.xpose.msra.mxu0 %v357
        %367 = vmatpush.bf16.xpose.msra.mxu0 %v356
        %368 = vmatpush.bf16.xpose.msra.mxu0 %v355
        %369 = vmatpush.bf16.xpose.msra.mxu0 %v354
        %370 = vmatpush.bf16.xpose.msra.mxu0 %v353
        %371 = vmatpush.bf16.xpose.msra.mxu0 %v352
        %372 = vmatpush.bf16.xpose.msra.mxu0 %v351
        %373 = vmatpush.bf16.xpose.msra.mxu0 %v350
        %374 = vmatmul.bf16.gmra.mxu0 %v220
        %v375 = vpop.f32.mrf.mxu0
        %v376 = vadd.f32 %v317, %v375
        %v377 = vpop.f32.mrf.mxu0
        %378 = vdwg.mxu0
        %v379 = vxor.u32 %v314, 2147483648
        %v380 = vmul.f32 %v379, 1.442695
        %v381 = vpow.pop %v380
        %v382 = vadd.f32 %v381, 1.0
        %v383 = vrcp.pop %v382
        %v384 = vmul.f32 %v382, %v383
        %v385 = vsub.f32 1.0, %v384
        %v386 = vmul.f32 %v383, %v385
        %v387 = vadd.f32 %v383, %v386
        %vm388 = vweird.f32 %v382
        %vm389 = vweird.f32 %v383
        %vm390 = vmor %vm388, %vm389
        %v391 = vsel %vm390, %v383, %v387
        %v392 = vand.u32 2147483647, %v382
        %vm393 = vcmp.eq.f32.partialorder %v392, 8.507059e+37
        %v394 = vand.u32 %v382, 2147483648
        %v395 = vor.u32 1.1754944e-38, %v394
        %v396 = vsel %vm393, %v395, %v391
        %v397 = vmul.f32 1.0, %v396
        %v398 = vmul.f32 %v314, %v397
        %v399 = vmul.f32 %v398, %v376
        %400 = vst [vmem:[%s204] sm:$0xff] %v399
        %s401 = sand.u32 %s117, 1
        %s402 = scalar_lea.sflag [#allocation3], %s401
        %s403 = sand.u32 %s117, 1
        %s404 = smul.addr %s403, 8
        %s405 = scalar_lea.vmem [#allocation2], %s404
        // Predicated region
        $region33: #{swiglu.1} parent=31 // pred_check
          %p406 = pneg %p127
        $region34: #{swiglu.1} parent=31 // pred_check_branch
          %408 = sbr.rel (%p406) target = $region36
        $region35: #{swiglu.1} parent=31 // pred_region
          %410 = vsyncadd %s402, 0
          %s411 = sadd.s32 %s21, %s22
          %s412 = smul.addr %s411, 8
          %s413 = scalar_lea.hbm %s3, %s412
          %s415 = sshll.u32 %s405, 4
          %s416 = int_to_ptr.vmem [resolvable:$true] %s415
          %s417 = sshll.u32 %s413, 4
          %s418 = int_to_ptr.hbm [resolvable:$true] %s417
          %420 = dma.vmem_to_hbm [thread:$0]  %s416, 128, %s418, %s402
        $region36: #{swiglu.1} parent=31 // pred_fallthru
          _
      $region32: #{swiglu.1} parent=5 // pred_fallthru
        _
      %p421 = scmp.le.s32.totalorder 2, %s12
      // Predicated region
      $region37: #{swiglu.1} parent=5 // pred_check
        %p422 = pneg %p421
      $region38: #{swiglu.1} parent=5 // pred_check_branch
        %424 = sbr.rel (%p422) target = $region40
      $region39: #{swiglu.1} parent=5 // pred_region
        %s425 = ssub.s32 %s12, 2
        // Predicated region
        $region41: #{swiglu.1} parent=39 // pred_check
          %p426 = pneg %p133
        $region42: #{swiglu.1} parent=39 // pred_check_branch
          %428 = sbr.rel (%p426) target = $region44
        $region43: #{swiglu.1} parent=39 // pred_region
          %s429 = sand.u32 %s118, 1
          %s430 = scalar_lea.sflag [#allocation3], %s429
          %s431 = sand.u32 %s118, 1
          %s432 = smul.addr %s431, 8
          %s433 = scalar_lea.vmem [#allocation2], %s432
          %435 = dma.done %s430, 128
        $region44: #{swiglu.1} parent=39 // pred_fallthru
          _
      $region40: #{swiglu.1} parent=5 // pred_fallthru
        _
    $region6: #{swiglu.1} parent=1 // loop_footer
      %s16 = sadd.s32 1, %s12
    $region7: #{swiglu.1} parent=1 // loop_footer_branch
      %11 = sbr.rel target = $region3
    $region8: #{swiglu.1} parent=1 // loop_exit
      _
    %436 = vsyncpa [#allocation3], 1
    %s437 = scalar_lea.sflag [#allocation3], 1
    %438 = vsyncpa %s437, 1

</llo_original>
